<compile_context>
chip_gen: v7x
topology: tpu7x:2x2x1
jax: 0.10.0
libtpu: 0.0.40
codegen_flags: <defaults>
</compile_context>

<pallas_src>
import functools

import jax
import jax.numpy as jnp
from jax.experimental import pallas as pl
from jax.experimental.pallas import tpu as pltpu

# ----------------------- small, module-consistent sizes ---------------------
B = 2              # batch
SEQ = 8            # sequence length (<= max_position_embeddings)
VOCAB = 64         # config.vocab_size (shrunk)
HIDDEN = 256       # config.hidden_size (lane-aligned: multiple of 128)
MAX_POS = 13       # config.max_position_embeddings
TYPE_VOCAB = 2     # config.type_vocab_size
PAD_TOKEN_ID = 0   # config.pad_token_id
LN_EPS = 1e-12     # config.layer_norm_eps


# ------------------------------- fused kernel --------------------------------
def bert_embeddings_kernel(ids_ref, word_hbm, bias_ref, g_ref, b_ref,
                           out_ref, rows_vmem, copy_sems, *, rows_per_tile):
    """One grid step = one row tile (here: one sequence of the batch).

    ids_ref   : [B*S]            int32, SMEM (scalar-prefetched token ids)
    word_hbm  : [V, D]           f32, HBM (memory_space=pl.ANY) word table
    bias_ref  : [S, D]           f32, VMEM  pre-folded pos + token_type slab
    g_ref     : [1, D]           f32, VMEM  LayerNorm weight
    b_ref     : [1, D]           f32, VMEM  LayerNorm bias
    out_ref   : [S, D]           f32, VMEM  output tile (lane-dense, D=256)
    rows_vmem : [S, D]           f32 scratch for gathered word-embedding rows
    copy_sems : DMA sems, one per gathered row
    """
    t = pl.program_id(0)
    base = t * rows_per_tile

    # --- DMA row gather: HBM word-table row ids[base + r] -> VMEM scratch ---
    copies = []
    for r in range(rows_per_tile):            # small static unroll
        tok = ids_ref[base + r]                # scalar read from SMEM
        cp = pltpu.make_async_copy(
            word_hbm.at[pl.ds(tok, 1), :],     # [1, D] source row in HBM
            rows_vmem.at[pl.ds(r, 1), :],      # [1, D] dest row in VMEM
            copy_sems.at[r])
        cp.start()
        copies.append(cp)
    for cp in copies:
        cp.wait()

    # --- word + (position + token_type) -------------------------------------
    x = rows_vmem[...] + bias_ref[...]

    # --- LayerNorm(eps=1e-12), single-pass stats, all f32 --------------------
    mean = jnp.mean(x, axis=-1, keepdims=True)
    mean_sq = jnp.mean(x * x, axis=-1, keepdims=True)
    var = mean_sq - mean * mean
    y = (x - mean) * jax.lax.rsqrt(var + LN_EPS)
    out_ref[...] = y * g_ref[...] + b_ref[...]
    # TODO(synk): nn.Dropout(hidden_dropout_prob) is identity at inference;
    # training-mode dropout (pltpu.prng_* mask) intentionally omitted.
    # TODO(synk): token_type_ids hard-coded to the buffered default (row 0);
    # caller-supplied non-zero token_type_ids would need their own gather.


# ------------------------------- wrapper --------------------------------------
@jax.jit
def bert_embeddings_forward(params, input_ids):
    bsz, seq = input_ids.shape
    hidden = params["word_emb"].shape[1]
    ids_flat = input_ids.reshape(-1).astype(jnp.int32)        # [B*S], -> SMEM

    # Pre-fold position + token_type(=0) embeddings into one [S, D] bias slab.
    bias = params["pos_emb"][:seq, :] + params["type_emb"][0][None, :]

    kernel = functools.partial(bert_embeddings_kernel, rows_per_tile=seq)

    grid_spec = pltpu.PrefetchScalarGridSpec(
        num_scalar_prefetch=1,                 # ids_flat -> SMEM
        grid=(bsz,),                           # one row tile (sequence) per step
        in_specs=[
            pl.BlockSpec(memory_space=pl.ANY),                    # word table (HBM)
            pl.BlockSpec((seq, hidden), lambda t, ids: (0, 0)),   # bias slab
            pl.BlockSpec((1, hidden), lambda t, ids: (0, 0)),     # gamma
            pl.BlockSpec((1, hidden), lambda t, ids: (0, 0)),     # beta
        ],
        out_specs=pl.BlockSpec((seq, hidden), lambda t, ids: (t, 0)),
        scratch_shapes=[
            pltpu.VMEM((seq, hidden), jnp.float32),               # gathered rows
            pltpu.SemaphoreType.DMA((seq,)),                      # per-row sems
        ],
    )

    out2d = pl.pallas_call(
        kernel,
        out_shape=jax.ShapeDtypeStruct((bsz * seq, hidden), jnp.float32),
        grid_spec=grid_spec,
        compiler_params=pltpu.CompilerParams(
            dimension_semantics=("parallel",)),
        cost_estimate=pl.CostEstimate(
            flops=10 * bsz * seq * hidden,
            transcendentals=bsz * seq,
            bytes_accessed=4 * (2 * bsz * seq * hidden + seq * hidden)),
    )(ids_flat, params["word_emb"], bias,
      params["ln_gamma"], params["ln_beta"])

    return out2d.reshape(bsz, seq, hidden)     # metadata-only reshape in XLA


# ------------------------- pure-JAX reference (for checking) -----------------
def bert_embeddings_reference(params, input_ids):
    seq = input_ids.shape[1]
    we = jnp.take(params["word_emb"], input_ids, axis=0)          # [B, S, D]
    te = params["type_emb"][0][None, None, :]
    pe = params["pos_emb"][:seq][None, :, :]
    x = we + te + pe
    mean = jnp.mean(x, axis=-1, keepdims=True)
    var = jnp.mean(jnp.square(x - mean), axis=-1, keepdims=True)
    y = (x - mean) * jax.lax.rsqrt(var + LN_EPS)
    return y * params["ln_gamma"] + params["ln_beta"]


# --------------------------- parameter initialization ------------------------
def init_params(key):
    k_w, k_p, k_t = jax.random.split(key, 3)
    word = 0.02 * jax.random.normal(k_w, (VOCAB, HIDDEN), jnp.float32)
    # nn.Embedding(padding_idx=pad_token_id) zero-initializes the padding row.
    word = word.at[PAD_TOKEN_ID].set(0.0)
    return {
        "word_emb": word,
        "pos_emb": 0.02 * jax.random.normal(k_p, (MAX_POS, HIDDEN), jnp.float32),
        "type_emb": 0.02 * jax.random.normal(k_t, (TYPE_VOCAB, HIDDEN), jnp.float32),
        "ln_gamma": jnp.ones((1, HIDDEN), jnp.float32),
        "ln_beta": jnp.zeros((1, HIDDEN), jnp.float32),
    }


# ----------------------------------- main -------------------------------------
if __name__ == "__main__":
    key = jax.random.PRNGKey(0)
    k_ids, k_par = jax.random.split(key)

    input_ids = jax.random.randint(k_ids, (B, SEQ), 0, VOCAB, dtype=jnp.int32)
    params = init_params(k_par)

    out = bert_embeddings_forward(params, input_ids)
    jax.block_until_ready(out)

    ref = bert_embeddings_reference(params, input_ids)
    assert out.shape == (B, SEQ, HIDDEN)
    assert bool(jnp.all(jnp.isfinite(out)))
    max_err = float(jnp.max(jnp.abs(out - ref)))
    assert jnp.allclose(out, ref, atol=1e-4, rtol=1e-4), max_err
    print("KERNEL_OK")
</pallas_src>

<mosaic_0001>
module attributes {stable_mosaic.version = 11 : i64} {
  func.func @bert_embeddings_kernel(%arg0: i32, %arg1: memref<16xi32, #tpu.memory_space<smem>>, %arg2: memref<64x256xf32, #tpu.memory_space<any>>, %arg3: memref<8x256xf32, #tpu.memory_space<vmem>>, %arg4: memref<1x256xf32, #tpu.memory_space<vmem>>, %arg5: memref<1x256xf32, #tpu.memory_space<vmem>>, %arg6: memref<8x256xf32, #tpu.memory_space<vmem>>, %arg7: memref<8x256xf32, #tpu.memory_space<vmem>>, %arg8: memref<8x!tpu.dma_semaphore, #tpu.memory_space<semaphore_mem>>) attributes {dimension_semantics = [#tpu.dimension_semantics<parallel>], iteration_bounds = array<i64: 2>, scalar_prefetch = 1 : i64, scratch_operands = 2 : i64, tpu.core_type = #tpu.core_type<tc>, window_params = [{}, {pipeline_mode = #tpu.pipeline_mode<synchronous>, transform_indices = @transform_1, window_bounds = array<i64: 8, 256>}, {pipeline_mode = #tpu.pipeline_mode<synchronous>, transform_indices = @transform_2, window_bounds = array<i64: 1, 256>}, {pipeline_mode = #tpu.pipeline_mode<synchronous>, transform_indices = @transform_3, window_bounds = array<i64: 1, 256>}, {transform_indices = @transform_4, window_bounds = array<i64: 8, 256>}]} {
    %c8_i32 = arith.constant 8 : i32
    %0 = arith.muli %arg0, %c8_i32 : i32
    %c0_i32 = arith.constant 0 : i32
    %1 = arith.addi %0, %c0_i32 : i32
    %2 = arith.index_cast %1 : i32 to index
    %3 = memref.load %arg1[%2] : memref<16xi32, #tpu.memory_space<smem>>
    %c0_i32_0 = arith.constant 0 : i32
    %c0_i32_1 = arith.constant 0 : i32
    %4 = tpu.memref_slice %arg2[%3, %c0_i32_1] : memref<64x256xf32, #tpu.memory_space<any>> -> memref<1x256xf32, #tpu.memory_space<any>>
    %c0_i32_2 = arith.constant 0 : i32
    %c0_i32_3 = arith.constant 0 : i32
    %5 = tpu.memref_slice %arg7[%c0_i32_2, %c0_i32_3] : memref<8x256xf32, #tpu.memory_space<vmem>> -> memref<1x256xf32, #tpu.memory_space<vmem>>
    %6 = tpu.memref_slice %arg8[%c0_i32_0] : memref<8x!tpu.dma_semaphore, #tpu.memory_space<semaphore_mem>> -> memref<1x!tpu.dma_semaphore, #tpu.memory_space<semaphore_mem>>
    %7 = tpu.memref_squeeze %6 : memref<1x!tpu.dma_semaphore, #tpu.memory_space<semaphore_mem>> -> memref<!tpu.dma_semaphore, #tpu.memory_space<semaphore_mem>>
    tpu.enqueue_dma source(%4 : memref<1x256xf32, #tpu.memory_space<any>>) target(%5 : memref<1x256xf32, #tpu.memory_space<vmem>>) target_semaphore(%7 : memref<!tpu.dma_semaphore, #tpu.memory_space<semaphore_mem>>)
    %c1_i32 = arith.constant 1 : i32
    %8 = arith.addi %0, %c1_i32 : i32
    %9 = arith.index_cast %8 : i32 to index
    %10 = memref.load %arg1[%9] : memref<16xi32, #tpu.memory_space<smem>>
    %c1_i32_4 = arith.constant 1 : i32
    %c0_i32_5 = arith.constant 0 : i32
    %11 = tpu.memref_slice %arg2[%10, %c0_i32_5] : memref<64x256xf32, #tpu.memory_space<any>> -> memref<1x256xf32, #tpu.memory_space<any>>
    %c1_i32_6 = arith.constant 1 : i32
    %c0_i32_7 = arith.constant 0 : i32
    %12 = tpu.memref_slice %arg7[%c1_i32_6, %c0_i32_7] : memref<8x256xf32, #tpu.memory_space<vmem>> -> memref<1x256xf32, #tpu.memory_space<vmem>>
    %13 = tpu.memref_slice %arg8[%c1_i32_4] : memref<8x!tpu.dma_semaphore, #tpu.memory_space<semaphore_mem>> -> memref<1x!tpu.dma_semaphore, #tpu.memory_space<semaphore_mem>>
    %14 = tpu.memref_squeeze %13 : memref<1x!tpu.dma_semaphore, #tpu.memory_space<semaphore_mem>> -> memref<!tpu.dma_semaphore, #tpu.memory_space<semaphore_mem>>
    tpu.enqueue_dma source(%11 : memref<1x256xf32, #tpu.memory_space<any>>) target(%12 : memref<1x256xf32, #tpu.memory_space<vmem>>) target_semaphore(%14 : memref<!tpu.dma_semaphore, #tpu.memory_space<semaphore_mem>>)
    %c2_i32 = arith.constant 2 : i32
    %15 = arith.addi %0, %c2_i32 : i32
    %16 = arith.index_cast %15 : i32 to index
    %17 = memref.load %arg1[%16] : memref<16xi32, #tpu.memory_space<smem>>
    %c2_i32_8 = arith.constant 2 : i32
    %c0_i32_9 = arith.constant 0 : i32
    %18 = tpu.memref_slice %arg2[%17, %c0_i32_9] : memref<64x256xf32, #tpu.memory_space<any>> -> memref<1x256xf32, #tpu.memory_space<any>>
    %c2_i32_10 = arith.constant 2 : i32
    %c0_i32_11 = arith.constant 0 : i32
    %19 = tpu.memref_slice %arg7[%c2_i32_10, %c0_i32_11] : memref<8x256xf32, #tpu.memory_space<vmem>> -> memref<1x256xf32, #tpu.memory_space<vmem>>
    %20 = tpu.memref_slice %arg8[%c2_i32_8] : memref<8x!tpu.dma_semaphore, #tpu.memory_space<semaphore_mem>> -> memref<1x!tpu.dma_semaphore, #tpu.memory_space<semaphore_mem>>
    %21 = tpu.memref_squeeze %20 : memref<1x!tpu.dma_semaphore, #tpu.memory_space<semaphore_mem>> -> memref<!tpu.dma_semaphore, #tpu.memory_space<semaphore_mem>>
    tpu.enqueue_dma source(%18 : memref<1x256xf32, #tpu.memory_space<any>>) target(%19 : memref<1x256xf32, #tpu.memory_space<vmem>>) target_semaphore(%21 : memref<!tpu.dma_semaphore, #tpu.memory_space<semaphore_mem>>)
    %c3_i32 = arith.constant 3 : i32
    %22 = arith.addi %0, %c3_i32 : i32
    %23 = arith.index_cast %22 : i32 to index
    %24 = memref.load %arg1[%23] : memref<16xi32, #tpu.memory_space<smem>>
    %c3_i32_12 = arith.constant 3 : i32
    %c0_i32_13 = arith.constant 0 : i32
    %25 = tpu.memref_slice %arg2[%24, %c0_i32_13] : memref<64x256xf32, #tpu.memory_space<any>> -> memref<1x256xf32, #tpu.memory_space<any>>
    %c3_i32_14 = arith.constant 3 : i32
    %c0_i32_15 = arith.constant 0 : i32
    %26 = tpu.memref_slice %arg7[%c3_i32_14, %c0_i32_15] : memref<8x256xf32, #tpu.memory_space<vmem>> -> memref<1x256xf32, #tpu.memory_space<vmem>>
    %27 = tpu.memref_slice %arg8[%c3_i32_12] : memref<8x!tpu.dma_semaphore, #tpu.memory_space<semaphore_mem>> -> memref<1x!tpu.dma_semaphore, #tpu.memory_space<semaphore_mem>>
    %28 = tpu.memref_squeeze %27 : memref<1x!tpu.dma_semaphore, #tpu.memory_space<semaphore_mem>> -> memref<!tpu.dma_semaphore, #tpu.memory_space<semaphore_mem>>
    tpu.enqueue_dma source(%25 : memref<1x256xf32, #tpu.memory_space<any>>) target(%26 : memref<1x256xf32, #tpu.memory_space<vmem>>) target_semaphore(%28 : memref<!tpu.dma_semaphore, #tpu.memory_space<semaphore_mem>>)
    %c4_i32 = arith.constant 4 : i32
    %29 = arith.addi %0, %c4_i32 : i32
    %30 = arith.index_cast %29 : i32 to index
    %31 = memref.load %arg1[%30] : memref<16xi32, #tpu.memory_space<smem>>
    %c4_i32_16 = arith.constant 4 : i32
    %c0_i32_17 = arith.constant 0 : i32
    %32 = tpu.memref_slice %arg2[%31, %c0_i32_17] : memref<64x256xf32, #tpu.memory_space<any>> -> memref<1x256xf32, #tpu.memory_space<any>>
    %c4_i32_18 = arith.constant 4 : i32
    %c0_i32_19 = arith.constant 0 : i32
    %33 = tpu.memref_slice %arg7[%c4_i32_18, %c0_i32_19] : memref<8x256xf32, #tpu.memory_space<vmem>> -> memref<1x256xf32, #tpu.memory_space<vmem>>
    %34 = tpu.memref_slice %arg8[%c4_i32_16] : memref<8x!tpu.dma_semaphore, #tpu.memory_space<semaphore_mem>> -> memref<1x!tpu.dma_semaphore, #tpu.memory_space<semaphore_mem>>
    %35 = tpu.memref_squeeze %34 : memref<1x!tpu.dma_semaphore, #tpu.memory_space<semaphore_mem>> -> memref<!tpu.dma_semaphore, #tpu.memory_space<semaphore_mem>>
    tpu.enqueue_dma source(%32 : memref<1x256xf32, #tpu.memory_space<any>>) target(%33 : memref<1x256xf32, #tpu.memory_space<vmem>>) target_semaphore(%35 : memref<!tpu.dma_semaphore, #tpu.memory_space<semaphore_mem>>)
    %c5_i32 = arith.constant 5 : i32
    %36 = arith.addi %0, %c5_i32 : i32
    %37 = arith.index_cast %36 : i32 to index
    %38 = memref.load %arg1[%37] : memref<16xi32, #tpu.memory_space<smem>>
    %c5_i32_20 = arith.constant 5 : i32
    %c0_i32_21 = arith.constant 0 : i32
    %39 = tpu.memref_slice %arg2[%38, %c0_i32_21] : memref<64x256xf32, #tpu.memory_space<any>> -> memref<1x256xf32, #tpu.memory_space<any>>
    %c5_i32_22 = arith.constant 5 : i32
    %c0_i32_23 = arith.constant 0 : i32
    %40 = tpu.memref_slice %arg7[%c5_i32_22, %c0_i32_23] : memref<8x256xf32, #tpu.memory_space<vmem>> -> memref<1x256xf32, #tpu.memory_space<vmem>>
    %41 = tpu.memref_slice %arg8[%c5_i32_20] : memref<8x!tpu.dma_semaphore, #tpu.memory_space<semaphore_mem>> -> memref<1x!tpu.dma_semaphore, #tpu.memory_space<semaphore_mem>>
    %42 = tpu.memref_squeeze %41 : memref<1x!tpu.dma_semaphore, #tpu.memory_space<semaphore_mem>> -> memref<!tpu.dma_semaphore, #tpu.memory_space<semaphore_mem>>
    tpu.enqueue_dma source(%39 : memref<1x256xf32, #tpu.memory_space<any>>) target(%40 : memref<1x256xf32, #tpu.memory_space<vmem>>) target_semaphore(%42 : memref<!tpu.dma_semaphore, #tpu.memory_space<semaphore_mem>>)
    %c6_i32 = arith.constant 6 : i32
    %43 = arith.addi %0, %c6_i32 : i32
    %44 = arith.index_cast %43 : i32 to index
    %45 = memref.load %arg1[%44] : memref<16xi32, #tpu.memory_space<smem>>
    %c6_i32_24 = arith.constant 6 : i32
    %c0_i32_25 = arith.constant 0 : i32
    %46 = tpu.memref_slice %arg2[%45, %c0_i32_25] : memref<64x256xf32, #tpu.memory_space<any>> -> memref<1x256xf32, #tpu.memory_space<any>>
    %c6_i32_26 = arith.constant 6 : i32
    %c0_i32_27 = arith.constant 0 : i32
    %47 = tpu.memref_slice %arg7[%c6_i32_26, %c0_i32_27] : memref<8x256xf32, #tpu.memory_space<vmem>> -> memref<1x256xf32, #tpu.memory_space<vmem>>
    %48 = tpu.memref_slice %arg8[%c6_i32_24] : memref<8x!tpu.dma_semaphore, #tpu.memory_space<semaphore_mem>> -> memref<1x!tpu.dma_semaphore, #tpu.memory_space<semaphore_mem>>
    %49 = tpu.memref_squeeze %48 : memref<1x!tpu.dma_semaphore, #tpu.memory_space<semaphore_mem>> -> memref<!tpu.dma_semaphore, #tpu.memory_space<semaphore_mem>>
    tpu.enqueue_dma source(%46 : memref<1x256xf32, #tpu.memory_space<any>>) target(%47 : memref<1x256xf32, #tpu.memory_space<vmem>>) target_semaphore(%49 : memref<!tpu.dma_semaphore, #tpu.memory_space<semaphore_mem>>)
    %c7_i32 = arith.constant 7 : i32
    %50 = arith.addi %0, %c7_i32 : i32
    %51 = arith.index_cast %50 : i32 to index
    %52 = memref.load %arg1[%51] : memref<16xi32, #tpu.memory_space<smem>>
    %c7_i32_28 = arith.constant 7 : i32
    %c0_i32_29 = arith.constant 0 : i32
    %53 = tpu.memref_slice %arg2[%52, %c0_i32_29] : memref<64x256xf32, #tpu.memory_space<any>> -> memref<1x256xf32, #tpu.memory_space<any>>
    %c7_i32_30 = arith.constant 7 : i32
    %c0_i32_31 = arith.constant 0 : i32
    %54 = tpu.memref_slice %arg7[%c7_i32_30, %c0_i32_31] : memref<8x256xf32, #tpu.memory_space<vmem>> -> memref<1x256xf32, #tpu.memory_space<vmem>>
    %55 = tpu.memref_slice %arg8[%c7_i32_28] : memref<8x!tpu.dma_semaphore, #tpu.memory_space<semaphore_mem>> -> memref<1x!tpu.dma_semaphore, #tpu.memory_space<semaphore_mem>>
    %56 = tpu.memref_squeeze %55 : memref<1x!tpu.dma_semaphore, #tpu.memory_space<semaphore_mem>> -> memref<!tpu.dma_semaphore, #tpu.memory_space<semaphore_mem>>
    tpu.enqueue_dma source(%53 : memref<1x256xf32, #tpu.memory_space<any>>) target(%54 : memref<1x256xf32, #tpu.memory_space<vmem>>) target_semaphore(%56 : memref<!tpu.dma_semaphore, #tpu.memory_space<semaphore_mem>>)
    %c0_i32_32 = arith.constant 0 : i32
    %c0_i32_33 = arith.constant 0 : i32
    %57 = tpu.memref_slice %arg2[%3, %c0_i32_33] : memref<64x256xf32, #tpu.memory_space<any>> -> memref<1x256xf32, #tpu.memory_space<any>>
    %c0_i32_34 = arith.constant 0 : i32
    %c0_i32_35 = arith.constant 0 : i32
    %58 = tpu.memref_slice %arg7[%c0_i32_34, %c0_i32_35] : memref<8x256xf32, #tpu.memory_space<vmem>> -> memref<1x256xf32, #tpu.memory_space<vmem>>
    %59 = tpu.memref_slice %arg8[%c0_i32_32] : memref<8x!tpu.dma_semaphore, #tpu.memory_space<semaphore_mem>> -> memref<1x!tpu.dma_semaphore, #tpu.memory_space<semaphore_mem>>
    %60 = tpu.memref_squeeze %59 : memref<1x!tpu.dma_semaphore, #tpu.memory_space<semaphore_mem>> -> memref<!tpu.dma_semaphore, #tpu.memory_space<semaphore_mem>>
    tpu.wait_dma2 semaphore(%60 : memref<!tpu.dma_semaphore, #tpu.memory_space<semaphore_mem>>) src(%57 : memref<1x256xf32, #tpu.memory_space<any>>) dst(%58 : memref<1x256xf32, #tpu.memory_space<vmem>>)
    %c1_i32_36 = arith.constant 1 : i32
    %c0_i32_37 = arith.constant 0 : i32
    %61 = tpu.memref_slice %arg2[%10, %c0_i32_37] : memref<64x256xf32, #tpu.memory_space<any>> -> memref<1x256xf32, #tpu.memory_space<any>>
    %c1_i32_38 = arith.constant 1 : i32
    %c0_i32_39 = arith.constant 0 : i32
    %62 = tpu.memref_slice %arg7[%c1_i32_38, %c0_i32_39] : memref<8x256xf32, #tpu.memory_space<vmem>> -> memref<1x256xf32, #tpu.memory_space<vmem>>
    %63 = tpu.memref_slice %arg8[%c1_i32_36] : memref<8x!tpu.dma_semaphore, #tpu.memory_space<semaphore_mem>> -> memref<1x!tpu.dma_semaphore, #tpu.memory_space<semaphore_mem>>
    %64 = tpu.memref_squeeze %63 : memref<1x!tpu.dma_semaphore, #tpu.memory_space<semaphore_mem>> -> memref<!tpu.dma_semaphore, #tpu.memory_space<semaphore_mem>>
    tpu.wait_dma2 semaphore(%64 : memref<!tpu.dma_semaphore, #tpu.memory_space<semaphore_mem>>) src(%61 : memref<1x256xf32, #tpu.memory_space<any>>) dst(%62 : memref<1x256xf32, #tpu.memory_space<vmem>>)
    %c2_i32_40 = arith.constant 2 : i32
    %c0_i32_41 = arith.constant 0 : i32
    %65 = tpu.memref_slice %arg2[%17, %c0_i32_41] : memref<64x256xf32, #tpu.memory_space<any>> -> memref<1x256xf32, #tpu.memory_space<any>>
    %c2_i32_42 = arith.constant 2 : i32
    %c0_i32_43 = arith.constant 0 : i32
    %66 = tpu.memref_slice %arg7[%c2_i32_42, %c0_i32_43] : memref<8x256xf32, #tpu.memory_space<vmem>> -> memref<1x256xf32, #tpu.memory_space<vmem>>
    %67 = tpu.memref_slice %arg8[%c2_i32_40] : memref<8x!tpu.dma_semaphore, #tpu.memory_space<semaphore_mem>> -> memref<1x!tpu.dma_semaphore, #tpu.memory_space<semaphore_mem>>
    %68 = tpu.memref_squeeze %67 : memref<1x!tpu.dma_semaphore, #tpu.memory_space<semaphore_mem>> -> memref<!tpu.dma_semaphore, #tpu.memory_space<semaphore_mem>>
    tpu.wait_dma2 semaphore(%68 : memref<!tpu.dma_semaphore, #tpu.memory_space<semaphore_mem>>) src(%65 : memref<1x256xf32, #tpu.memory_space<any>>) dst(%66 : memref<1x256xf32, #tpu.memory_space<vmem>>)
    %c3_i32_44 = arith.constant 3 : i32
    %c0_i32_45 = arith.constant 0 : i32
    %69 = tpu.memref_slice %arg2[%24, %c0_i32_45] : memref<64x256xf32, #tpu.memory_space<any>> -> memref<1x256xf32, #tpu.memory_space<any>>
    %c3_i32_46 = arith.constant 3 : i32
    %c0_i32_47 = arith.constant 0 : i32
    %70 = tpu.memref_slice %arg7[%c3_i32_46, %c0_i32_47] : memref<8x256xf32, #tpu.memory_space<vmem>> -> memref<1x256xf32, #tpu.memory_space<vmem>>
    %71 = tpu.memref_slice %arg8[%c3_i32_44] : memref<8x!tpu.dma_semaphore, #tpu.memory_space<semaphore_mem>> -> memref<1x!tpu.dma_semaphore, #tpu.memory_space<semaphore_mem>>
    %72 = tpu.memref_squeeze %71 : memref<1x!tpu.dma_semaphore, #tpu.memory_space<semaphore_mem>> -> memref<!tpu.dma_semaphore, #tpu.memory_space<semaphore_mem>>
    tpu.wait_dma2 semaphore(%72 : memref<!tpu.dma_semaphore, #tpu.memory_space<semaphore_mem>>) src(%69 : memref<1x256xf32, #tpu.memory_space<any>>) dst(%70 : memref<1x256xf32, #tpu.memory_space<vmem>>)
    %c4_i32_48 = arith.constant 4 : i32
    %c0_i32_49 = arith.constant 0 : i32
    %73 = tpu.memref_slice %arg2[%31, %c0_i32_49] : memref<64x256xf32, #tpu.memory_space<any>> -> memref<1x256xf32, #tpu.memory_space<any>>
    %c4_i32_50 = arith.constant 4 : i32
    %c0_i32_51 = arith.constant 0 : i32
    %74 = tpu.memref_slice %arg7[%c4_i32_50, %c0_i32_51] : memref<8x256xf32, #tpu.memory_space<vmem>> -> memref<1x256xf32, #tpu.memory_space<vmem>>
    %75 = tpu.memref_slice %arg8[%c4_i32_48] : memref<8x!tpu.dma_semaphore, #tpu.memory_space<semaphore_mem>> -> memref<1x!tpu.dma_semaphore, #tpu.memory_space<semaphore_mem>>
    %76 = tpu.memref_squeeze %75 : memref<1x!tpu.dma_semaphore, #tpu.memory_space<semaphore_mem>> -> memref<!tpu.dma_semaphore, #tpu.memory_space<semaphore_mem>>
    tpu.wait_dma2 semaphore(%76 : memref<!tpu.dma_semaphore, #tpu.memory_space<semaphore_mem>>) src(%73 : memref<1x256xf32, #tpu.memory_space<any>>) dst(%74 : memref<1x256xf32, #tpu.memory_space<vmem>>)
    %c5_i32_52 = arith.constant 5 : i32
    %c0_i32_53 = arith.constant 0 : i32
    %77 = tpu.memref_slice %arg2[%38, %c0_i32_53] : memref<64x256xf32, #tpu.memory_space<any>> -> memref<1x256xf32, #tpu.memory_space<any>>
    %c5_i32_54 = arith.constant 5 : i32
    %c0_i32_55 = arith.constant 0 : i32
    %78 = tpu.memref_slice %arg7[%c5_i32_54, %c0_i32_55] : memref<8x256xf32, #tpu.memory_space<vmem>> -> memref<1x256xf32, #tpu.memory_space<vmem>>
    %79 = tpu.memref_slice %arg8[%c5_i32_52] : memref<8x!tpu.dma_semaphore, #tpu.memory_space<semaphore_mem>> -> memref<1x!tpu.dma_semaphore, #tpu.memory_space<semaphore_mem>>
    %80 = tpu.memref_squeeze %79 : memref<1x!tpu.dma_semaphore, #tpu.memory_space<semaphore_mem>> -> memref<!tpu.dma_semaphore, #tpu.memory_space<semaphore_mem>>
    tpu.wait_dma2 semaphore(%80 : memref<!tpu.dma_semaphore, #tpu.memory_space<semaphore_mem>>) src(%77 : memref<1x256xf32, #tpu.memory_space<any>>) dst(%78 : memref<1x256xf32, #tpu.memory_space<vmem>>)
    %c6_i32_56 = arith.constant 6 : i32
    %c0_i32_57 = arith.constant 0 : i32
    %81 = tpu.memref_slice %arg2[%45, %c0_i32_57] : memref<64x256xf32, #tpu.memory_space<any>> -> memref<1x256xf32, #tpu.memory_space<any>>
    %c6_i32_58 = arith.constant 6 : i32
    %c0_i32_59 = arith.constant 0 : i32
    %82 = tpu.memref_slice %arg7[%c6_i32_58, %c0_i32_59] : memref<8x256xf32, #tpu.memory_space<vmem>> -> memref<1x256xf32, #tpu.memory_space<vmem>>
    %83 = tpu.memref_slice %arg8[%c6_i32_56] : memref<8x!tpu.dma_semaphore, #tpu.memory_space<semaphore_mem>> -> memref<1x!tpu.dma_semaphore, #tpu.memory_space<semaphore_mem>>
    %84 = tpu.memref_squeeze %83 : memref<1x!tpu.dma_semaphore, #tpu.memory_space<semaphore_mem>> -> memref<!tpu.dma_semaphore, #tpu.memory_space<semaphore_mem>>
    tpu.wait_dma2 semaphore(%84 : memref<!tpu.dma_semaphore, #tpu.memory_space<semaphore_mem>>) src(%81 : memref<1x256xf32, #tpu.memory_space<any>>) dst(%82 : memref<1x256xf32, #tpu.memory_space<vmem>>)
    %c7_i32_60 = arith.constant 7 : i32
    %c0_i32_61 = arith.constant 0 : i32
    %85 = tpu.memref_slice %arg2[%52, %c0_i32_61] : memref<64x256xf32, #tpu.memory_space<any>> -> memref<1x256xf32, #tpu.memory_space<any>>
    %c7_i32_62 = arith.constant 7 : i32
    %c0_i32_63 = arith.constant 0 : i32
    %86 = tpu.memref_slice %arg7[%c7_i32_62, %c0_i32_63] : memref<8x256xf32, #tpu.memory_space<vmem>> -> memref<1x256xf32, #tpu.memory_space<vmem>>
    %87 = tpu.memref_slice %arg8[%c7_i32_60] : memref<8x!tpu.dma_semaphore, #tpu.memory_space<semaphore_mem>> -> memref<1x!tpu.dma_semaphore, #tpu.memory_space<semaphore_mem>>
    %88 = tpu.memref_squeeze %87 : memref<1x!tpu.dma_semaphore, #tpu.memory_space<semaphore_mem>> -> memref<!tpu.dma_semaphore, #tpu.memory_space<semaphore_mem>>
    tpu.wait_dma2 semaphore(%88 : memref<!tpu.dma_semaphore, #tpu.memory_space<semaphore_mem>>) src(%85 : memref<1x256xf32, #tpu.memory_space<any>>) dst(%86 : memref<1x256xf32, #tpu.memory_space<vmem>>)
    %c0 = arith.constant 0 : index
    %c0_64 = arith.constant 0 : index
    %89 = vector.load %arg7[%c0, %c0_64] : memref<8x256xf32, #tpu.memory_space<vmem>>, vector<8x256xf32>
    %c0_65 = arith.constant 0 : index
    %c0_66 = arith.constant 0 : index
    %90 = vector.load %arg3[%c0_65, %c0_66] : memref<8x256xf32, #tpu.memory_space<vmem>>, vector<8x256xf32>
    %91 = arith.addf %89, %90 : vector<8x256xf32>
    %cst = arith.constant dense<0.000000e+00> : vector<8xf32>
    %92 = vector.multi_reduction <add>, %91, %cst [1] : vector<8x256xf32> to vector<8xf32>
    %93 = vector.shape_cast %92 : vector<8xf32> to vector<8x1xf32>
    %cst_67 = arith.constant 2.560000e+02 : f32
    %94 = vector.broadcast %cst_67 : f32 to vector<8x1xf32>
    %95 = arith.divf %93, %94 : vector<8x1xf32>
    %96 = arith.mulf %91, %91 : vector<8x256xf32>
    %cst_68 = arith.constant dense<0.000000e+00> : vector<8xf32>
    %97 = vector.multi_reduction <add>, %96, %cst_68 [1] : vector<8x256xf32> to vector<8xf32>
    %98 = vector.shape_cast %97 : vector<8xf32> to vector<8x1xf32>
    %cst_69 = arith.constant 2.560000e+02 : f32
    %99 = vector.broadcast %cst_69 : f32 to vector<8x1xf32>
    %100 = arith.divf %98, %99 : vector<8x1xf32>
    %101 = arith.mulf %95, %95 : vector<8x1xf32>
    %102 = arith.subf %100, %101 : vector<8x1xf32>
    %103 = vector.broadcast %95 : vector<8x1xf32> to vector<8x256xf32>
    %104 = arith.subf %91, %103 : vector<8x256xf32>
    %cst_70 = arith.constant 9.99999996E-13 : f32
    %105 = vector.broadcast %cst_70 : f32 to vector<8x1xf32>
    %106 = arith.addf %102, %105 : vector<8x1xf32>
    %107 = math.rsqrt %106 : vector<8x1xf32>
    %108 = vector.broadcast %107 : vector<8x1xf32> to vector<8x256xf32>
    %109 = arith.mulf %104, %108 : vector<8x256xf32>
    %c0_71 = arith.constant 0 : index
    %c0_72 = arith.constant 0 : index
    %110 = vector.load %arg4[%c0_71, %c0_72] : memref<1x256xf32, #tpu.memory_space<vmem>>, vector<1x256xf32>
    %111 = vector.broadcast %110 : vector<1x256xf32> to vector<8x256xf32>
    %112 = arith.mulf %109, %111 : vector<8x256xf32>
    %c0_73 = arith.constant 0 : index
    %c0_74 = arith.constant 0 : index
    %113 = vector.load %arg5[%c0_73, %c0_74] : memref<1x256xf32, #tpu.memory_space<vmem>>, vector<1x256xf32>
    %114 = vector.broadcast %113 : vector<1x256xf32> to vector<8x256xf32>
    %115 = arith.addf %112, %114 : vector<8x256xf32>
    %c0_75 = arith.constant 0 : index
    %c0_76 = arith.constant 0 : index
    %116 = vector.load %arg6[%c0_75, %c0_76] : memref<8x256xf32, #tpu.memory_space<vmem>>, vector<8x256xf32>
    tpu.vector_store %arg6[%c0_75, %c0_76], %115 {strides = array<i32>} : memref<8x256xf32, #tpu.memory_space<vmem>>, vector<8x256xf32>,
    return
  }
  func.func @transform_1(%arg0: i32, %arg1: memref<16xi32, #tpu.memory_space<smem>>) -> (i32, i32) {
    %c0_i32 = arith.constant 0 : i32
    %c0_i32_0 = arith.constant 0 : i32
    %c0_i32_1 = arith.constant 0 : i32
    return %c0_i32, %c0_i32_0 : i32, i32
  }
  func.func @transform_2(%arg0: i32, %arg1: memref<16xi32, #tpu.memory_space<smem>>) -> (i32, i32) {
    %c0_i32 = arith.constant 0 : i32
    %c0_i32_0 = arith.constant 0 : i32
    %c0_i32_1 = arith.constant 0 : i32
    return %c0_i32, %c0_i32_0 : i32, i32
  }
  func.func @transform_3(%arg0: i32, %arg1: memref<16xi32, #tpu.memory_space<smem>>) -> (i32, i32) {
    %c0_i32 = arith.constant 0 : i32
    %c0_i32_0 = arith.constant 0 : i32
    %c0_i32_1 = arith.constant 0 : i32
    return %c0_i32, %c0_i32_0 : i32, i32
  }
  func.func @transform_4(%arg0: i32, %arg1: memref<16xi32, #tpu.memory_space<smem>>) -> (i32, i32) {
    %c0_i32 = arith.constant 0 : i32
    %c0_i32_0 = arith.constant 0 : i32
    return %arg0, %c0_i32 : i32, i32
  }
}

</mosaic_0001>

<llo_original>
// kernel: bert_embeddings_forward.1
$region0: #{bert_embeddings_forward.1}
  #allocation0 [shape = 'u32[]', space=smem, size = 0x4, offset = 0x4, fixed_abs, tag = 'smem constant byte address 0x4 - core index']
  #allocation1 [shape = 'u32[144,128]{1,0:T(1,128)}', space=vmem, size = 0x12000, scoped, tag = 'internal scratch']
  #allocation2 [shape = 'f32[8,256]{1,0:T(8,128)}', space=vmem, size = 0x2000, scoped, tag = 'scratch operand']
  #allocation3 [shape = 's32[8]{0}', space=sflag, size = 0x20, scoped, tag = 'scratch operand']
  #allocation4 [shape = 's32[1]{0}', space=sflag, size = 0x4, scoped, tag = 'scoped memory for bert_embeddings_forward.1']
  #allocation5 [shape = 'u8[512]{0}', space=smem, size = 0x200, scoped, tag = 'prefetched SMEM operand 0']
  #allocation8 [shape = 's32[]', space=sflag, size = 0x4, offset = 0, fixed_abs, tag = 'sflag constant byte address 0x0 - dummy sync flag']
  #allocation9 [shape = 's32[]', space=sflag, size = 0x4, offset = 0, fixed_abs, tag = 'sflag constant byte address 0x0 - dummy sync flag']
  #allocation10 [shape = 's32[]', space=sflag, size = 0x4, offset = 0, fixed_abs, tag = 'sflag constant byte address 0x0 - dummy sync flag']
  #allocation11 [shape = 's32[]', space=sflag, size = 0x4, offset = 0, fixed_abs, tag = 'sflag constant byte address 0x0 - dummy sync flag']
  #allocation12 [shape = 's32[]', space=sflag, size = 0x4, offset = 0, fixed_abs, tag = 'sflag constant byte address 0x0 - dummy sync flag']
  #allocation13 [shape = 's32[]', space=sflag, size = 0x4, offset = 0, fixed_abs, tag = 'sflag constant byte address 0x0 - dummy sync flag']
  #allocation14 [shape = 's32[]', space=sflag, size = 0x4, offset = 0, fixed_abs, tag = 'sflag constant byte address 0x0 - dummy sync flag']
  #allocation15 [shape = 's32[]', space=sflag, size = 0x4, offset = 0, fixed_abs, tag = 'sflag constant byte address 0x0 - dummy sync flag']
  %s0 = inlined_call_operand.vmem [shape: s32[16], index: 0, kind: input, shape index: {}]
  %s1 = inlined_call_operand.hbm [shape: f32[64,256], index: 1, kind: input, shape index: {}]
  %s2 = inlined_call_operand.vmem [shape: f32[8,256], index: 2, kind: input, shape index: {}]
  %s3 = inlined_call_operand.vmem [shape: f32[1,256], index: 3, kind: input, shape index: {}]
  %s4 = inlined_call_operand.vmem [shape: f32[1,256], index: 4, kind: input, shape index: {}]
  %s5 = inlined_call_operand.hbm [shape: f32[16,256], index: 5, kind: output, shape index: {}]
  %s6 = sld [smem:[#allocation0]]
  $region45: #{bert_embeddings_forward.1} parent=0
    _
  %s8 = ssub.s32 1, %s6
  %s9 = scalar_select 0, %s8, %s6
  %s10 = sshll.u32 %s0, 4
  %s11 = int_to_ptr.vmem [resolvable:$true] %s10
  %13 = dma.vmem_to_smem %s11, 16, [#allocation5], [#allocation4]
  %14 = dma.done [#allocation4], 16
  %15 = sfence
  $region1: #{bert_embeddings_forward.1} parent=0
    #allocation6 [shape = 'u8[16384]{0}', space=vmem, size = 0x4000, scoped, tag = 'output window, operand 0']
    #allocation7 [shape = 's32[2]{0}', space=sflag, size = 0x8, scoped, tag = 'scoped memory for bert_embeddings_forward.1']
    %16 = vsyncpa [#allocation7], 0
    %s17 = scalar_lea.sflag [#allocation7], 1
    %18 = vsyncpa %s17, 0
    loop: start=0, step=1, limit=4
    $region2: #{bert_embeddings_forward.1} parent=1 // loop_pre_header
      _
    $region3: #{bert_embeddings_forward.1} parent=1 // loop_header
      %s20 = sphi 0, %s24
      %p21 = scmp.ge.s32.totalorder %s20, 4
      %s28 = sphi 0, %s28
      %s30 = sphi 0, %s28
      %s31 = sphi 0, %s30
      %s45 = sphi 0, %s31
      %s49 = sphi 0, %s49
      %s51 = sphi 0, %s49
      %s52 = sphi 0, %s51
      %s66 = sphi 0, %s52
      %s70 = sphi 0, %s70
      %s72 = sphi 0, %s70
      %s73 = sphi 0, %s72
      %s87 = sphi 0, %s73
      %s93 = sphi 0, %s95
      %s96 = sphi 0, %s93
      %s97 = sphi 0, %s96
      %s113 = sphi 0, %s97
    $region4: #{bert_embeddings_forward.1} parent=1 // loop_header_branch
      %23 = sbr.rel (%p21) target = $region8
    $region5: #{bert_embeddings_forward.1} parent=1 // loop_body
      %s25 = ssub.s32 %s20, 1
      %s26 = ssub.s32 %s20, 2
      %s27 = sadd.s32 %s20, 1
      %s29 = sadd.s32 %s28, 1
      %p32 = scmp.eq.s32.totalorder %s20, 1
      %p33 = scmp.ne.s32.totalorder %s28, %s30
      %p34 = scmp.eq.s32.totalorder %s20, 0
      %p35 = por %p33, %p34
      %p36 = scmp.ne.s32.totalorder %s28, %s30
      %p37 = scmp.eq.s32.totalorder %s25, 1
      %p38 = por %p36, %p37
      %p39 = scmp.ne.s32.totalorder %s30, %s31
      %p40 = scmp.eq.s32.totalorder %s25, 0
      %p41 = por %p39, %p40
      %p42 = scmp.ne.s32.totalorder %s30, %s31
      %p43 = scmp.eq.s32.totalorder %s26, 1
      %p44 = por %p42, %p43
      %p46 = scmp.ne.s32.totalorder %s31, %s45
      %p47 = scmp.eq.s32.totalorder %s26, 0
      %p48 = por %p46, %p47
      %s50 = sadd.s32 %s49, 1
      %p53 = scmp.eq.s32.totalorder %s20, 1
      %p54 = scmp.ne.s32.totalorder %s49, %s51
      %p55 = scmp.eq.s32.totalorder %s20, 0
      %p56 = por %p54, %p55
      %p57 = scmp.ne.s32.totalorder %s49, %s51
      %p58 = scmp.eq.s32.totalorder %s25, 1
      %p59 = por %p57, %p58
      %p60 = scmp.ne.s32.totalorder %s51, %s52
      %p61 = scmp.eq.s32.totalorder %s25, 0
      %p62 = por %p60, %p61
      %p63 = scmp.ne.s32.totalorder %s51, %s52
      %p64 = scmp.eq.s32.totalorder %s26, 1
      %p65 = por %p63, %p64
      %p67 = scmp.ne.s32.totalorder %s52, %s66
      %p68 = scmp.eq.s32.totalorder %s26, 0
      %p69 = por %p67, %p68
      %s71 = sadd.s32 %s70, 1
      %p74 = scmp.eq.s32.totalorder %s20, 1
      %p75 = scmp.ne.s32.totalorder %s70, %s72
      %p76 = scmp.eq.s32.totalorder %s20, 0
      %p77 = por %p75, %p76
      %p78 = scmp.ne.s32.totalorder %s70, %s72
      %p79 = scmp.eq.s32.totalorder %s25, 1
      %p80 = por %p78, %p79
      %p81 = scmp.ne.s32.totalorder %s72, %s73
      %p82 = scmp.eq.s32.totalorder %s25, 0
      %p83 = por %p81, %p82
      %p84 = scmp.ne.s32.totalorder %s72, %s73
      %p85 = scmp.eq.s32.totalorder %s26, 1
      %p86 = por %p84, %p85
      %p88 = scmp.ne.s32.totalorder %s73, %s87
      %p89 = scmp.eq.s32.totalorder %s26, 0
      %p90 = por %p88, %p89
      %s91 = ssub.s32 %s20, %s27
      %p92 = scmp.eq.s32.totalorder %s91, 0
      %s94 = sadd.s32 %s93, 1
      %s95 = scalar_select %p92, %s93, %s94
      %p98 = pneg %p92
      %p99 = scmp.eq.s32.totalorder %s20, 1
      %p100 = por %p98, %p99
      %p101 = scmp.ne.s32.totalorder %s93, %s96
      %p102 = scmp.eq.s32.totalorder %s20, 0
      %p103 = por %p101, %p102
      %p104 = scmp.ne.s32.totalorder %s93, %s96
      %p105 = scmp.eq.s32.totalorder %s25, 1
      %p106 = por %p104, %p105
      %p107 = scmp.ne.s32.totalorder %s96, %s97
      %p108 = scmp.eq.s32.totalorder %s25, 0
      %p109 = por %p107, %p108
      %p110 = scmp.ne.s32.totalorder %s96, %s97
      %p111 = scmp.eq.s32.totalorder %s26, 1
      %p112 = por %p110, %p111
      %p114 = scmp.ne.s32.totalorder %s97, %s113
      %p115 = scmp.eq.s32.totalorder %s26, 0
      %p116 = por %p114, %p115
      %p117 = scmp.le.s32.totalorder 1, %s20
      %p118 = scmp.lt.s32.totalorder %s20, 3
      %p119 = pnand %p117, %p118
      %p120 = pneg %p119
      // Predicated region
      $region9: #{bert_embeddings_forward.1} parent=5 // pred_check
        _
      $region10: #{bert_embeddings_forward.1} parent=5 // pred_check_branch
        %122 = sbr.rel (%p119) target = $region12
      $region11: #{bert_embeddings_forward.1} parent=5 // pred_region
        %s123 = ssub.s32 %s20, 1
        // Predicated region
        $region13: #{bert_embeddings_forward.1} parent=11 // pred_check
          %p124 = pneg %p41
        $region14: #{bert_embeddings_forward.1} parent=11 // pred_check_branch
          %126 = sbr.rel (%p124) target = $region16
        $region15: #{bert_embeddings_forward.1} parent=11 // pred_region
          _
        $region16: #{bert_embeddings_forward.1} parent=11 // pred_fallthru
          _
        // Predicated region
        $region17: #{bert_embeddings_forward.1} parent=11 // pred_check
          %p127 = pneg %p62
        $region18: #{bert_embeddings_forward.1} parent=11 // pred_check_branch
          %129 = sbr.rel (%p127) target = $region20
        $region19: #{bert_embeddings_forward.1} parent=11 // pred_region
          _
        $region20: #{bert_embeddings_forward.1} parent=11 // pred_fallthru
          _
        // Predicated region
        $region21: #{bert_embeddings_forward.1} parent=11 // pred_check
          %p130 = pneg %p83
        $region22: #{bert_embeddings_forward.1} parent=11 // pred_check_branch
          %132 = sbr.rel (%p130) target = $region24
        $region23: #{bert_embeddings_forward.1} parent=11 // pred_region
          _
        $region24: #{bert_embeddings_forward.1} parent=11 // pred_fallthru
          _
      $region12: #{bert_embeddings_forward.1} parent=5 // pred_fallthru
        _
      %p133 = scmp.lt.s32.totalorder %s20, 2
      // Predicated region
      $region25: #{bert_embeddings_forward.1} parent=5 // pred_check
        %p134 = pneg %p133
      $region26: #{bert_embeddings_forward.1} parent=5 // pred_check_branch
        %136 = sbr.rel (%p134) target = $region28
      $region27: #{bert_embeddings_forward.1} parent=5 // pred_region
        _
      $region28: #{bert_embeddings_forward.1} parent=5 // pred_fallthru
        _
      %p137 = scmp.le.s32.totalorder 1, %s20
      %p138 = scmp.lt.s32.totalorder %s20, 3
      %p139 = pnand %p137, %p138
      %p140 = pneg %p139
      // Predicated region
      $region29: #{bert_embeddings_forward.1} parent=5 // pred_check
        _
      $region30: #{bert_embeddings_forward.1} parent=5 // pred_check_branch
        %142 = sbr.rel (%p139) target = $region32
      $region31: #{bert_embeddings_forward.1} parent=5 // pred_region
        %s143 = ssub.s32 %s20, 1
        %p144 = pneg %p41
        %p145 = pneg %p38
        %p146 = pneg %p62
        %p147 = pneg %p59
        %p148 = pneg %p83
        %p149 = pneg %p80
        %p150 = pneg %p109
        %p151 = pneg %p106
        %s152 = sand.u32 %s96, 1
        %s153 = scalar_lea.sflag [#allocation7], %s152
        %s154 = sand.u32 %s96, 1
        %s155 = smul.addr %s154, 16
        %s156 = scalar_lea.vmem [#allocation6], %s155
        %s157 = smul.u32 %s25, 8
        %s158 = sld [smem:[#allocation5 + %s157]]
        %s159 = sshrl.u32 %s158, 3
        %s160 = sand.u32 %s158, 7
        %s161 = smul.u32 %s159, 16
        %s162 = sadd.s32 %s160, %s161
        %s163 = smul.addr %s162, 16
        %s164 = scalar_lea.hbm %s1, %s163
        %s166 = sshll.u32 [#allocation2], 4
        %s167 = int_to_ptr.vmem [resolvable:$true] %s166
        %169 = dma.hbm_to_vmem [thread:$0]  %s164, 32, %s167, [#allocation3], 128, 128, 1
        %s170 = sadd.s32 %s157, 1
        %s171 = sld [smem:[#allocation5 + %s170]]
        %s172 = sshrl.u32 %s171, 3
        %s173 = sand.u32 %s171, 7
        %s174 = smul.u32 %s172, 16
        %s175 = sadd.s32 %s173, %s174
        %s176 = smul.addr %s175, 16
        %s177 = scalar_lea.hbm %s1, %s176
        %s178 = scalar_lea.vmem [#allocation2], 1
        %s179 = scalar_lea.sflag [#allocation3], 1
        %s181 = sshll.u32 %s178, 4
        %s182 = int_to_ptr.vmem [resolvable:$true] %s181
        %184 = dma.hbm_to_vmem [thread:$0]  %s177, 32, %s182, %s179, 128, 128, 1
        %s185 = sadd.s32 %s157, 2
        %s186 = sld [smem:[#allocation5 + %s185]]
        %s187 = sshrl.u32 %s186, 3
        %s188 = sand.u32 %s186, 7
        %s189 = smul.u32 %s187, 16
        %s190 = sadd.s32 %s188, %s189
        %s191 = smul.addr %s190, 16
        %s192 = scalar_lea.hbm %s1, %s191
        %s193 = scalar_lea.vmem [#allocation2], 2
        %s194 = scalar_lea.sflag [#allocation3], 2
        %s196 = sshll.u32 %s193, 4
        %s197 = int_to_ptr.vmem [resolvable:$true] %s196
        %199 = dma.hbm_to_vmem [thread:$0]  %s192, 32, %s197, %s194, 128, 128, 1
        %s200 = sadd.s32 %s157, 3
        %s201 = sld [smem:[#allocation5 + %s200]]
        %s202 = sshrl.u32 %s201, 3
        %s203 = sand.u32 %s201, 7
        %s204 = smul.u32 %s202, 16
        %s205 = sadd.s32 %s203, %s204
        %s206 = smul.addr %s205, 16
        %s207 = scalar_lea.hbm %s1, %s206
        %s208 = scalar_lea.vmem [#allocation2], 3
        %s209 = scalar_lea.sflag [#allocation3], 3
        %s211 = sshll.u32 %s208, 4
        %s212 = int_to_ptr.vmem [resolvable:$true] %s211
        %214 = dma.hbm_to_vmem [thread:$0]  %s207, 32, %s212, %s209, 128, 128, 1
        %s215 = sadd.s32 %s157, 4
        %s216 = sld [smem:[#allocation5 + %s215]]
        %s217 = sshrl.u32 %s216, 3
        %s218 = sand.u32 %s216, 7
        %s219 = smul.u32 %s217, 16
        %s220 = sadd.s32 %s218, %s219
        %s221 = smul.addr %s220, 16
        %s222 = scalar_lea.hbm %s1, %s221
        %s223 = scalar_lea.vmem [#allocation2], 4
        %s224 = scalar_lea.sflag [#allocation3], 4
        %s226 = sshll.u32 %s223, 4
        %s227 = int_to_ptr.vmem [resolvable:$true] %s226
        %229 = dma.hbm_to_vmem [thread:$0]  %s222, 32, %s227, %s224, 128, 128, 1
        %s230 = sadd.s32 %s157, 5
        %s231 = sld [smem:[#allocation5 + %s230]]
        %s232 = sshrl.u32 %s231, 3
        %s233 = sand.u32 %s231, 7
        %s234 = smul.u32 %s232, 16
        %s235 = sadd.s32 %s233, %s234
        %s236 = smul.addr %s235, 16
        %s237 = scalar_lea.hbm %s1, %s236
        %s238 = scalar_lea.vmem [#allocation2], 5
        %s239 = scalar_lea.sflag [#allocation3], 5
        %s241 = sshll.u32 %s238, 4
        %s242 = int_to_ptr.vmem [resolvable:$true] %s241
        %244 = dma.hbm_to_vmem [thread:$0]  %s237, 32, %s242, %s239, 128, 128, 1
        %s245 = sadd.s32 %s157, 6
        %s246 = sld [smem:[#allocation5 + %s245]]
        %s247 = sshrl.u32 %s246, 3
        %s248 = sand.u32 %s246, 7
        %s249 = smul.u32 %s247, 16
        %s250 = sadd.s32 %s248, %s249
        %s251 = smul.addr %s250, 16
        %s252 = scalar_lea.hbm %s1, %s251
        %s253 = scalar_lea.vmem [#allocation2], 6
        %s254 = scalar_lea.sflag [#allocation3], 6
        %s256 = sshll.u32 %s253, 4
        %s257 = int_to_ptr.vmem [resolvable:$true] %s256
        %259 = dma.hbm_to_vmem [thread:$0]  %s252, 32, %s257, %s254, 128, 128, 1
        %s260 = sadd.s32 %s157, 7
        %s261 = sld [smem:[#allocation5 + %s260]]
        %s262 = sshrl.u32 %s261, 3
        %s263 = sand.u32 %s261, 7
        %s264 = smul.u32 %s262, 16
        %s265 = sadd.s32 %s263, %s264
        %s266 = smul.addr %s265, 16
        %s267 = scalar_lea.hbm %s1, %s266
        %s268 = scalar_lea.vmem [#allocation2], 7
        %s269 = scalar_lea.sflag [#allocation3], 7
        %s271 = sshll.u32 %s268, 4
        %s272 = int_to_ptr.vmem [resolvable:$true] %s271
        %274 = dma.hbm_to_vmem [thread:$0]  %s267, 32, %s272, %s269, 128, 128, 1
        %s275 = smul.u32 1, 2
        %s276 = sshll.u32 %s275, 4
        %277 = dma.done [#allocation3], %s276
        %s278 = sshll.u32 %s275, 4
        %279 = dma.done %s179, %s278
        %s280 = sshll.u32 %s275, 4
        %281 = dma.done %s194, %s280
        %s282 = sshll.u32 %s275, 4
        %283 = dma.done %s209, %s282
        %s284 = sshll.u32 %s275, 4
        %285 = dma.done %s224, %s284
        %s286 = sshll.u32 %s275, 4
        %287 = dma.done %s239, %s286
        %s288 = sshll.u32 %s275, 4
        %289 = dma.done %s254, %s288
        %s290 = sshll.u32 %s275, 4
        %291 = dma.done %s269, %s290
        %v292 = vld [vmem:[#allocation2] sm:$0xff]
        %v293 = vld [vmem:[#allocation2 + $0x8] sm:$0xff]
        %v294 = vld [vmem:[%s2] sm:$0xff]
        %v295 = vld [vmem:[%s2 + $0x8] sm:$0xff]
        %v296 = vadd.f32 %v292, %v294
        %v297 = vadd.f32 %v293, %v295
        %v298 = vadd.f32 %v296, %v297
        %299 = vadd.xlane.f32.xlu0 %v298
        %v300 = vpop.xlane.xlu0 %299
        %v301 = vrcp.pop 256.0
        %v302 = vmul.f32 %v300, %v301
        %v303 = vmul.f32 %v296, %v296
        %v304 = vmul.f32 %v297, %v297
        %v305 = vadd.f32 %v303, %v304
        %306 = vadd.xlane.f32.xlu0 %v305
        %v307 = vpop.xlane.xlu0 %306
        %v308 = vmul.f32 %v307, %v301
        %v309 = vmul.f32 %v302, %v302
        %v310 = vsub.f32 %v308, %v309
        %v311 = vsub.f32 %v296, %v302
        %v312 = vsub.f32 %v297, %v302
        %v313 = vadd.f32 %v310, 1e-12
        %v314 = vrsqrt.pop %v313
        %v315 = vmul.f32 %v311, %v314
        %v316 = vmul.f32 %v312, %v314
        %v317 = vld [vmem:[%s3] sm:$0x3]
        %v319 = vlaneseq
        %v320 = vshrl.u32 %v319, 7
        %v321 = vsub.s32 0, %v320
        %v322 = vrot.slane %v317, %v321
        %v323 = vlaneseq
        %v324 = vshrl.u32 %v323, 7
        %v325 = vsub.s32 1, %v324
        %v326 = vrot.slane %v317, %v325
        %v329 = vmul.f32 %v315, %v322
        %v330 = vmul.f32 %v316, %v326
        %v331 = vld [vmem:[%s4] sm:$0x3]
        %v333 = vlaneseq
        %v334 = vshrl.u32 %v333, 7
        %v335 = vsub.s32 0, %v334
        %v336 = vrot.slane %v331, %v335
        %v337 = vlaneseq
        %v338 = vshrl.u32 %v337, 7
        %v339 = vsub.s32 1, %v338
        %v340 = vrot.slane %v331, %v339
        %v343 = vadd.f32 %v329, %v336
        %v344 = vadd.f32 %v330, %v340
        %345 = vst [vmem:[%s156] sm:$0xff] %v343
        %346 = vst [vmem:[%s156 + $0x8] sm:$0xff] %v344
        %s347 = sand.u32 %s96, 1
        %s348 = scalar_lea.sflag [#allocation7], %s347
        %s349 = sand.u32 %s96, 1
        %s350 = smul.addr %s349, 16
        %s351 = scalar_lea.vmem [#allocation6], %s350
        // Predicated region
        $region33: #{bert_embeddings_forward.1} parent=31 // pred_check
          %p352 = pneg %p106
        $region34: #{bert_embeddings_forward.1} parent=31 // pred_check_branch
          %354 = sbr.rel (%p352) target = $region36
        $region35: #{bert_embeddings_forward.1} parent=31 // pred_region
          %s356 = ssub.s32 256, 256
          %357 = vsyncadd %s348, %s356
          %s358 = smul.addr %s25, 2
          %s359 = smul.addr %s358, 128
          %s360 = scalar_lea.hbm %s5, %s359
          %s362 = sshll.u32 %s351, 4
          %s363 = int_to_ptr.vmem [resolvable:$true] %s362
          %365 = dma.vmem_to_hbm [thread:$0]  %s363, 256, %s360, %s348
        $region36: #{bert_embeddings_forward.1} parent=31 // pred_fallthru
          _
      $region32: #{bert_embeddings_forward.1} parent=5 // pred_fallthru
        _
      %p366 = scmp.le.s32.totalorder 2, %s20
      // Predicated region
      $region37: #{bert_embeddings_forward.1} parent=5 // pred_check
        %p367 = pneg %p366
      $region38: #{bert_embeddings_forward.1} parent=5 // pred_check_branch
        %369 = sbr.rel (%p367) target = $region40
      $region39: #{bert_embeddings_forward.1} parent=5 // pred_region
        %s370 = ssub.s32 %s20, 2
        // Predicated region
        $region41: #{bert_embeddings_forward.1} parent=39 // pred_check
          %p371 = pneg %p112
        $region42: #{bert_embeddings_forward.1} parent=39 // pred_check_branch
          %373 = sbr.rel (%p371) target = $region44
        $region43: #{bert_embeddings_forward.1} parent=39 // pred_region
          %s374 = sand.u32 %s97, 1
          %s375 = scalar_lea.sflag [#allocation7], %s374
          %s376 = sand.u32 %s97, 1
          %s377 = smul.addr %s376, 16
          %s378 = scalar_lea.vmem [#allocation6], %s377
          %379 = dma.done %s375, 256
        $region44: #{bert_embeddings_forward.1} parent=39 // pred_fallthru
          _
      $region40: #{bert_embeddings_forward.1} parent=5 // pred_fallthru
        _
    $region6: #{bert_embeddings_forward.1} parent=1 // loop_footer
      %s24 = sadd.s32 1, %s20
    $region7: #{bert_embeddings_forward.1} parent=1 // loop_footer_branch
      %19 = sbr.rel target = $region3
    $region8: #{bert_embeddings_forward.1} parent=1 // loop_exit
      _
    %380 = vsyncpa [#allocation7], 1
    %s381 = scalar_lea.sflag [#allocation7], 1
    %382 = vsyncpa %s381, 1
  %383 = vsyncmov [#allocation3]
  %s384 = vpop.sfrf %383
  %p385 = scmp.eq.s32.totalorder %s384, 0
  %p386 = pneg %p385
  %388 = shalt.err (%p386)
  %s389 = scalar_lea.sflag [#allocation3], 1
  %390 = vsyncmov %s389
  %s391 = vpop.sfrf %390
  %p392 = scmp.eq.s32.totalorder %s391, 0
  %p393 = pneg %p392
  %395 = shalt.err (%p393)
  %s396 = scalar_lea.sflag [#allocation3], 2
  %397 = vsyncmov %s396
  %s398 = vpop.sfrf %397
  %p399 = scmp.eq.s32.totalorder %s398, 0
  %p400 = pneg %p399
  %402 = shalt.err (%p400)
  %s403 = scalar_lea.sflag [#allocation3], 3
  %404 = vsyncmov %s403
  %s405 = vpop.sfrf %404
  %p406 = scmp.eq.s32.totalorder %s405, 0
  %p407 = pneg %p406
  %409 = shalt.err (%p407)
  %s410 = scalar_lea.sflag [#allocation3], 4
  %411 = vsyncmov %s410
  %s412 = vpop.sfrf %411
  %p413 = scmp.eq.s32.totalorder %s412, 0
  %p414 = pneg %p413
  %416 = shalt.err (%p414)
  %s417 = scalar_lea.sflag [#allocation3], 5
  %418 = vsyncmov %s417
  %s419 = vpop.sfrf %418
  %p420 = scmp.eq.s32.totalorder %s419, 0
  %p421 = pneg %p420
  %423 = shalt.err (%p421)
  %s424 = scalar_lea.sflag [#allocation3], 6
  %425 = vsyncmov %s424
  %s426 = vpop.sfrf %425
  %p427 = scmp.eq.s32.totalorder %s426, 0
  %p428 = pneg %p427
  %430 = shalt.err (%p428)
  %s431 = scalar_lea.sflag [#allocation3], 7
  %432 = vsyncmov %s431
  %s433 = vpop.sfrf %432
  %p434 = scmp.eq.s32.totalorder %s433, 0
  %p435 = pneg %p434
  %437 = shalt.err (%p435)

</llo_original>
